<compile_context>
chip_gen: v7x
topology: tpu7x:2x2x1
jax: 0.10.0
libtpu: 0.0.40
codegen_flags: <defaults>
</compile_context>

<pallas_src>
import math
from functools import partial

import jax
import jax.numpy as jnp
from jax import lax
from jax.experimental import pallas as pl
from jax.experimental.pallas import tpu as pltpu

HIDDEN = 512  # fixed by the module definition (nn.Linear(rank, 512))


# --------------------------- Stage 1: positional-embedding MLP ---------------------------
def _pos_mlp_kernel(w1_ref, b1_ref, w2_ref, pos_ref, *, tn, side, half, inv_side, inv_denom):
    # Row indices covered by this block, as a (TN, 1) column (1 lane wide -> cheap).
    row0 = (pl.program_id(0) * tn).astype(jnp.float32)
    idx = lax.broadcasted_iota(jnp.int32, (tn, 1), 0).astype(jnp.float32) + row0
    # n // side and n % side via float ops (exact while side < 2048; asserted in wrapper).
    h = jnp.floor((idx + 0.5) * inv_side)
    w = idx - h * side
    ch = (h - half) * inv_denom
    cw = (w - half) * inv_denom
    # K=2 contraction as two VPU outer products: coords @ W1.T + b1  ->  (TN, 512)
    hid = ch * w1_ref[0:1, :] + cw * w1_ref[1:2, :] + b1_ref[...]
    hid = jnp.maximum(hid, 0.0)  # ReLU
    # K=512 -> proper MXU work; f32 accumulation, cast only on the store.
    # TODO(synk): on v6e/v7x a bf16 cast of (hid, w2) would run nearer MXU peak, but
    # Stage 1 is one-shot and tiny, so f32 operands are kept for exactness.
    pos_ref[...] = jnp.dot(hid, w2_ref[...],
                           preferred_element_type=jnp.float32).astype(pos_ref.dtype)


# --------------------------- Stage 2: lane-dense tiled broadcast add ---------------------------
def _bcast_add_kernel(pos_ref, x_ref, o_ref):
    # Accumulate in f32 (free VPU work under HBM-bound slack); cast on the final store.
    o_ref[...] = (x_ref[...].astype(jnp.float32)
                  + pos_ref[...].astype(jnp.float32)).astype(o_ref.dtype)


def _vmem_plan():
    """(vmem_limit_bytes, per-block byte budget) adapted to the chip generation."""
    try:
        phys = int(pltpu.get_tpu_info().vmem_capacity_bytes)
    except Exception:
        phys = 64 << 20                                       # assume smallest (v7x)
    limit = max(16 << 20, min(phys - (16 << 20), 64 << 20))   # 48 MiB v7x, 64 MiB v5e/v6e
    budget = limit // 8                                       # 2*(in+out+pos) < 0.75*limit
    return limit, budget


def _select_tiles(B, M, itemsize, budget_bytes):
    """Co-select (TB, TC) for Stage 2.

    * TB = B when B < 8 (full dim is always legal), otherwise a multiple of 8
      (dense sublanes; never collapses to 1-row blocks).
    * TC is a multiple of 128 (or the full row) -> unmasked, lane-dense vst.
    * The sublane-PADDED x block (max(TB,8) * TC * itemsize) fits budget_bytes.
    * The grid keeps >= 2 programs whenever the data allows (v7x megacore).
    Partial tail blocks (cdiv grids) are handled by Pallas' boundary masking.
    """
    tb0 = B if B < 8 else 8
    pad0 = max(tb0, 8)
    max_tc = max(128, (budget_bytes // (pad0 * itemsize)) // 128 * 128)
    TC = M if M <= max_tc else max_tc
    if B < 8:
        TB = B
    else:
        max_tb = budget_bytes // (TC * itemsize)
        TB = min(max(8, (max_tb // 8) * 8), (B // 8) * 8)
    if pl.cdiv(B, TB) * pl.cdiv(M, TC) < 2:
        if M > 128:
            TC = max(128, (((M + 1) // 2 + 127) // 128) * 128)   # split columns in two
        elif B >= 16:
            TB = max(8, ((TB // 2) // 8) * 8)                    # else split rows
    return TB, TC


def pos_emb_mlp_swin_v1d(x, w1, b1, w2):
    """Forward of PosEmbMLPSwinv1D (rank=2, conv=False, training path).

    x:  [B, N, dim]
    w1: [2, 512]   (first Linear weight, transposed)
    b1: [512]
    w2: [512, dim] (second Linear weight, transposed)
    """
    B, N, D = x.shape
    side = math.isqrt(N)
    assert side * side == N, f"seq_length {N} must be a perfect square for rank=2"
    assert side < 2048, "float floor-div trick in Stage 1 requires side < 2048"
    # side == 1 would divide by zero in the reference; clamp the denominator instead.
    denom = float(side // 2) if side >= 2 else 1.0
    half = float(side // 2)

    vmem_limit, budget = _vmem_plan()
    itemsize = jnp.dtype(x.dtype).itemsize
    # Materialize pos in x's dtype when x is 16-bit: halves pos HBM write + re-reads.
    pos_dtype = x.dtype if itemsize < 4 else jnp.float32

    # ---- Stage 1: pos[N, D], computed once, tiled over N ----
    TN = N if N <= 512 else 512
    pos = pl.pallas_call(
        partial(_pos_mlp_kernel, tn=TN, side=float(side), half=half,
                inv_side=1.0 / float(side), inv_denom=1.0 / denom),
        out_shape=jax.ShapeDtypeStruct((N, D), pos_dtype),
        grid=(pl.cdiv(N, TN),),
        in_specs=[pl.BlockSpec((2, HIDDEN), lambda i: (0, 0)),      # W1.T   (resident)
                  pl.BlockSpec((1, HIDDEN), lambda i: (0, 0)),      # b1     (resident)
                  pl.BlockSpec((HIDDEN, D), lambda i: (0, 0))],     # W2.T   (resident)
        out_specs=pl.BlockSpec((TN, D), lambda i: (i, 0)),
        compiler_params=pltpu.CompilerParams(dimension_semantics=("parallel",)),
    )(w1.astype(jnp.float32),
      b1.reshape(1, HIDDEN).astype(jnp.float32),
      w2.astype(jnp.float32))

    # ---- Stage 2: tiled, pipelined, lane-dense broadcast add ----
    M = N * D
    x_flat = x.reshape(B, M)
    pos_flat = pos.reshape(1, M)

    TB, TC = _select_tiles(B, M, itemsize, budget)
    n_col = pl.cdiv(M, TC)
    n_row = pl.cdiv(B, TB)
    pos_isize = jnp.dtype(pos_dtype).itemsize

    out_flat = pl.pallas_call(
        _bcast_add_kernel,
        out_shape=jax.ShapeDtypeStruct((B, M), x.dtype),
        # Column axis OUTER, batch axis INNER: the pos block index is constant across
        # consecutive grid steps, so Pallas does not re-DMA it per row block.
        grid=(n_col, n_row),
        in_specs=[
            pl.BlockSpec((1, TC), lambda j, i: (0, j)),      # pos (broadcast over batch)
            pl.BlockSpec((TB, TC), lambda j, i: (i, j)),     # x
        ],
        out_specs=pl.BlockSpec((TB, TC), lambda j, i: (i, j)),
        compiler_params=pltpu.CompilerParams(
            dimension_semantics=("parallel", "parallel"),    # megacore sharding on v7x
            vmem_limit_bytes=vmem_limit),
        cost_estimate=pl.CostEstimate(
            flops=B * M,
            transcendentals=0,
            bytes_accessed=2 * B * M * itemsize + M * pos_isize),
    )(pos_flat, x_flat)

    # NOTE: no input_output_aliases -- x is not donated at a jit boundary here, and
    # aliasing without donation makes XLA insert a defensive copy of x. Callers that
    # donate x can re-enable {1: 0} for in-place writeback.
    return out_flat.reshape(B, N, D)


if __name__ == "__main__":
    # Small shapes consistent with the forward: batch=2, seq=64 (8x8 grid), dim=32
    B, N, D = 2, 64, 32
    key = jax.random.PRNGKey(0)
    k1, k2, k3, kx = jax.random.split(key, 4)

    # PyTorch Linear weights pre-transposed: w1 = W1.T ([2,512]), w2 = W2.T ([512,dim])
    w1 = jax.random.normal(k1, (2, HIDDEN), jnp.float32) * 0.02
    b1 = jax.random.normal(k2, (HIDDEN,), jnp.float32) * 0.02
    w2 = jax.random.normal(k3, (HIDDEN, D), jnp.float32) * 0.02
    x = jax.random.normal(kx, (B, N, D), jnp.float32)

    # Pure-JAX reference (matches the PyTorch forward).
    side = math.isqrt(N)
    g = jnp.stack(jnp.meshgrid(jnp.arange(side, dtype=jnp.float32),
                               jnp.arange(side, dtype=jnp.float32), indexing="ij"))
    g = (g - side // 2) / (side // 2)
    coords_ref = g.reshape(2, -1).T
    pos_ref = jnp.maximum(coords_ref @ w1 + b1, 0.0) @ w2
    ref = x + pos_ref[None]

    out = jax.block_until_ready(pos_emb_mlp_swin_v1d(x, w1, b1, w2))

    assert out.shape == (B, N, D)
    # Tolerance accounts for the MXU's multi-pass f32 emulation rounding slightly
    # differently from the XLA reference dot.
    assert jnp.allclose(out, ref, atol=1e-3, rtol=1e-3), "Pallas output mismatch vs reference"

    # TODO(synk): deploy-mode branch (x + cached relative_bias), rank=1 and conv=True
    # variants are trivial add / 1x1-Conv1d paths not exercised by the default config.
    # TODO(synk): for small-B bf16 inputs, fusing Stage 1 into Stage 2 (pos kept
    # resident in VMEM scratch) would remove the pos HBM round-trip entirely.
    print("KERNEL_OK")
</pallas_src>

<mosaic_0001>
module attributes {stable_mosaic.version = 11 : i64} {
  func.func @_pos_mlp_kernel(%arg0: i32, %arg1: memref<2x512xf32, #tpu.memory_space<vmem>>, %arg2: memref<1x512xf32, #tpu.memory_space<vmem>>, %arg3: memref<512x32xf32, #tpu.memory_space<vmem>>, %arg4: memref<64x32xf32, #tpu.memory_space<vmem>>) attributes {dimension_semantics = [#tpu.dimension_semantics<parallel>], iteration_bounds = array<i64: 1>, scalar_prefetch = 0 : i64, scratch_operands = 0 : i64, tpu.core_type = #tpu.core_type<tc>, window_params = [{pipeline_mode = #tpu.pipeline_mode<synchronous>, transform_indices = @transform_0, window_bounds = array<i64: 2, 512>}, {pipeline_mode = #tpu.pipeline_mode<synchronous>, transform_indices = @transform_1, window_bounds = array<i64: 1, 512>}, {pipeline_mode = #tpu.pipeline_mode<synchronous>, transform_indices = @transform_2, window_bounds = array<i64: 512, 32>}, {transform_indices = @transform_3, window_bounds = array<i64: 64, 32>}]} {
    %c64_i32 = arith.constant 64 : i32
    %0 = arith.muli %arg0, %c64_i32 : i32
    %1 = arith.sitofp %0 : i32 to f32
    %2 = tpu.iota {dimensions = array<i32: 0>} : vector<64x1xi32>
    %3 = arith.sitofp %2 : vector<64x1xi32> to vector<64x1xf32>
    %4 = vector.broadcast %1 : f32 to vector<64x1xf32>
    %5 = arith.addf %3, %4 : vector<64x1xf32>
    %cst = arith.constant 5.000000e-01 : f32
    %6 = vector.broadcast %cst : f32 to vector<64x1xf32>
    %7 = arith.addf %5, %6 : vector<64x1xf32>
    %cst_0 = arith.constant 1.250000e-01 : f32
    %8 = vector.broadcast %cst_0 : f32 to vector<64x1xf32>
    %9 = arith.mulf %7, %8 : vector<64x1xf32>
    %10 = math.floor %9 : vector<64x1xf32>
    %cst_1 = arith.constant 8.000000e+00 : f32
    %11 = vector.broadcast %cst_1 : f32 to vector<64x1xf32>
    %12 = arith.mulf %10, %11 : vector<64x1xf32>
    %13 = arith.subf %5, %12 : vector<64x1xf32>
    %cst_2 = arith.constant 4.000000e+00 : f32
    %14 = vector.broadcast %cst_2 : f32 to vector<64x1xf32>
    %15 = arith.subf %10, %14 : vector<64x1xf32>
    %cst_3 = arith.constant 2.500000e-01 : f32
    %16 = vector.broadcast %cst_3 : f32 to vector<64x1xf32>
    %17 = arith.mulf %15, %16 : vector<64x1xf32>
    %cst_4 = arith.constant 4.000000e+00 : f32
    %18 = vector.broadcast %cst_4 : f32 to vector<64x1xf32>
    %19 = arith.subf %13, %18 : vector<64x1xf32>
    %cst_5 = arith.constant 2.500000e-01 : f32
    %20 = vector.broadcast %cst_5 : f32 to vector<64x1xf32>
    %21 = arith.mulf %19, %20 : vector<64x1xf32>
    %c0 = arith.constant 0 : index
    %c0_6 = arith.constant 0 : index
    %22 = vector.load %arg1[%c0, %c0_6] : memref<2x512xf32, #tpu.memory_space<vmem>>, vector<1x512xf32>
    %23 = vector.broadcast %17 : vector<64x1xf32> to vector<64x512xf32>
    %24 = vector.broadcast %22 : vector<1x512xf32> to vector<64x512xf32>
    %25 = arith.mulf %23, %24 : vector<64x512xf32>
    %c1 = arith.constant 1 : index
    %c0_7 = arith.constant 0 : index
    %26 = vector.load %arg1[%c1, %c0_7] : memref<2x512xf32, #tpu.memory_space<vmem>>, vector<1x512xf32>
    %27 = vector.broadcast %21 : vector<64x1xf32> to vector<64x512xf32>
    %28 = vector.broadcast %26 : vector<1x512xf32> to vector<64x512xf32>
    %29 = arith.mulf %27, %28 : vector<64x512xf32>
    %30 = arith.addf %25, %29 : vector<64x512xf32>
    %c0_8 = arith.constant 0 : index
    %c0_9 = arith.constant 0 : index
    %31 = vector.load %arg2[%c0_8, %c0_9] : memref<1x512xf32, #tpu.memory_space<vmem>>, vector<1x512xf32>
    %32 = vector.broadcast %31 : vector<1x512xf32> to vector<64x512xf32>
    %33 = arith.addf %30, %32 : vector<64x512xf32>
    %cst_10 = arith.constant 0.000000e+00 : f32
    %34 = vector.broadcast %cst_10 : f32 to vector<64x512xf32>
    %35 = arith.maximumf %33, %34 : vector<64x512xf32>
    %c0_11 = arith.constant 0 : index
    %c0_12 = arith.constant 0 : index
    %36 = vector.load %arg3[%c0_11, %c0_12] : memref<512x32xf32, #tpu.memory_space<vmem>>, vector<512x32xf32>
    %cst_13 = arith.constant dense<0.000000e+00> : vector<64x32xf32>
    %37 = tpu.matmul %35, %36, %cst_13 {dimension_numbers = #tpu.dot_dimension_numbers<[1], [0], [0], [1], [0, 0, 1, 1], [], []>} : vector<64x512xf32>, vector<512x32xf32>, vector<64x32xf32> -> vector<64x32xf32>
    %c0_14 = arith.constant 0 : index
    %c0_15 = arith.constant 0 : index
    %38 = vector.load %arg4[%c0_14, %c0_15] : memref<64x32xf32, #tpu.memory_space<vmem>>, vector<64x32xf32>
    tpu.vector_store %arg4[%c0_14, %c0_15], %37 {strides = array<i32>} : memref<64x32xf32, #tpu.memory_space<vmem>>, vector<64x32xf32>,
    return
  }
  func.func @transform_0(%arg0: i32) -> (i32, i32) {
    %c0_i32 = arith.constant 0 : i32
    %c0_i32_0 = arith.constant 0 : i32
    %c0_i32_1 = arith.constant 0 : i32
    return %c0_i32, %c0_i32_0 : i32, i32
  }
  func.func @transform_1(%arg0: i32) -> (i32, i32) {
    %c0_i32 = arith.constant 0 : i32
    %c0_i32_0 = arith.constant 0 : i32
    %c0_i32_1 = arith.constant 0 : i32
    return %c0_i32, %c0_i32_0 : i32, i32
  }
  func.func @transform_2(%arg0: i32) -> (i32, i32) {
    %c0_i32 = arith.constant 0 : i32
    %c0_i32_0 = arith.constant 0 : i32
    %c0_i32_1 = arith.constant 0 : i32
    return %c0_i32, %c0_i32_0 : i32, i32
  }
  func.func @transform_3(%arg0: i32) -> (i32, i32) {
    %c0_i32 = arith.constant 0 : i32
    %c0_i32_0 = arith.constant 0 : i32
    return %arg0, %c0_i32 : i32, i32
  }
}

</mosaic_0001>

<llo_original>
// kernel: tpu_custom_call.1
$region0: #{tpu_custom_call.1}
  #allocation0 [shape = 'u32[]', space=smem, size = 0x4, offset = 0x4, fixed_abs, tag = 'smem constant byte address 0x4 - core index']
  #allocation1 [shape = 'u32[144,128]{1,0:T(1,128)}', space=vmem, size = 0x12000, scoped, tag = 'internal scratch']
  %s0 = inlined_call_operand.vmem [shape: f32[2,512], index: 0, kind: input, shape index: {}]
  %s1 = inlined_call_operand.vmem [shape: f32[1,512], index: 1, kind: input, shape index: {}]
  %s2 = inlined_call_operand.vmem [shape: f32[512,32], index: 2, kind: input, shape index: {}]
  %s3 = inlined_call_operand.vmem [shape: f32[64,32], index: 3, kind: output, shape index: {}]
  %s4 = sld [smem:[#allocation0]]
  $region22: #{tpu_custom_call.1} parent=0
    _
  %s6 = ssub.s32 1, %s4
  %s7 = scalar_select 0, %s6, %s4
  // Predicated region
  $region2: #{tpu_custom_call.1} parent=0 // pred_check
    _
  $region3: #{tpu_custom_call.1} parent=0 // pred_check_branch
    %9 = sbr.rel (0) target = $region5
  $region4: #{tpu_custom_call.1} parent=0 // pred_region
    _
  $region5: #{tpu_custom_call.1} parent=0 // pred_fallthru
    _
  // Predicated region
  $region6: #{tpu_custom_call.1} parent=0 // pred_check
    _
  $region7: #{tpu_custom_call.1} parent=0 // pred_check_branch
    %11 = sbr.rel (0) target = $region9
  $region8: #{tpu_custom_call.1} parent=0 // pred_region
    _
  $region9: #{tpu_custom_call.1} parent=0 // pred_fallthru
    _
  // Predicated region
  $region10: #{tpu_custom_call.1} parent=0 // pred_check
    _
  $region11: #{tpu_custom_call.1} parent=0 // pred_check_branch
    %13 = sbr.rel (0) target = $region13
  $region12: #{tpu_custom_call.1} parent=0 // pred_region
    _
  $region13: #{tpu_custom_call.1} parent=0 // pred_fallthru
    _
  %s14 = smul.u32 0, 64
  %s15 = scvt.s32.f32 %s14
  %v16 = vlaneseq
  %v17 = vshrl.u32 %v16, 7
  %v18 = vadd.s32 %v17, 8
  %v19 = vadd.s32 %v17, 16
  %v20 = vadd.s32 %v17, 24
  %v21 = vadd.s32 %v17, 32
  %v22 = vadd.s32 %v17, 40
  %v23 = vadd.s32 %v17, 48
  %v24 = vadd.s32 %v17, 56
  %v25 = vcvt.s32.f32 %v17
  %v26 = vcvt.s32.f32 %v18
  %v27 = vcvt.s32.f32 %v19
  %v28 = vcvt.s32.f32 %v20
  %v29 = vcvt.s32.f32 %v21
  %v30 = vcvt.s32.f32 %v22
  %v31 = vcvt.s32.f32 %v23
  %v32 = vcvt.s32.f32 %v24
  %v33 = vstv %s15
  %v34 = vadd.f32 %v25, %v33
  %v35 = vadd.f32 %v26, %v33
  %v36 = vadd.f32 %v27, %v33
  %v37 = vadd.f32 %v28, %v33
  %v38 = vadd.f32 %v29, %v33
  %v39 = vadd.f32 %v30, %v33
  %v40 = vadd.f32 %v31, %v33
  %v41 = vadd.f32 %v32, %v33
  %v42 = vadd.f32 %v34, 0.5
  %v43 = vadd.f32 %v35, 0.5
  %v44 = vadd.f32 %v36, 0.5
  %v45 = vadd.f32 %v37, 0.5
  %v46 = vadd.f32 %v38, 0.5
  %v47 = vadd.f32 %v39, 0.5
  %v48 = vadd.f32 %v40, 0.5
  %v49 = vadd.f32 %v41, 0.5
  %v50 = vmul.f32 %v42, 0.125
  %v51 = vmul.f32 %v43, 0.125
  %v52 = vmul.f32 %v44, 0.125
  %v53 = vmul.f32 %v45, 0.125
  %v54 = vmul.f32 %v46, 0.125
  %v55 = vmul.f32 %v47, 0.125
  %v56 = vmul.f32 %v48, 0.125
  %v57 = vmul.f32 %v49, 0.125
  %v58 = vfloor.f32 %v50
  %v59 = vfloor.f32 %v51
  %v60 = vfloor.f32 %v52
  %v61 = vfloor.f32 %v53
  %v62 = vfloor.f32 %v54
  %v63 = vfloor.f32 %v55
  %v64 = vfloor.f32 %v56
  %v65 = vfloor.f32 %v57
  %v66 = vmul.f32 %v58, 8.0
  %v67 = vmul.f32 %v59, 8.0
  %v68 = vmul.f32 %v60, 8.0
  %v69 = vmul.f32 %v61, 8.0
  %v70 = vmul.f32 %v62, 8.0
  %v71 = vmul.f32 %v63, 8.0
  %v72 = vmul.f32 %v64, 8.0
  %v73 = vmul.f32 %v65, 8.0
  %v74 = vsub.f32 %v34, %v66
  %v75 = vsub.f32 %v35, %v67
  %v76 = vsub.f32 %v36, %v68
  %v77 = vsub.f32 %v37, %v69
  %v78 = vsub.f32 %v38, %v70
  %v79 = vsub.f32 %v39, %v71
  %v80 = vsub.f32 %v40, %v72
  %v81 = vsub.f32 %v41, %v73
  %v82 = vsub.f32 %v58, 4.0
  %v83 = vsub.f32 %v59, 4.0
  %v84 = vsub.f32 %v60, 4.0
  %v85 = vsub.f32 %v61, 4.0
  %v86 = vsub.f32 %v62, 4.0
  %v87 = vsub.f32 %v63, 4.0
  %v88 = vsub.f32 %v64, 4.0
  %v89 = vsub.f32 %v65, 4.0
  %v90 = vmul.f32 %v82, 0.25
  %v91 = vmul.f32 %v83, 0.25
  %v92 = vmul.f32 %v84, 0.25
  %v93 = vmul.f32 %v85, 0.25
  %v94 = vmul.f32 %v86, 0.25
  %v95 = vmul.f32 %v87, 0.25
  %v96 = vmul.f32 %v88, 0.25
  %v97 = vmul.f32 %v89, 0.25
  %v98 = vsub.f32 %v74, 4.0
  %v99 = vsub.f32 %v75, 4.0
  %v100 = vsub.f32 %v76, 4.0
  %v101 = vsub.f32 %v77, 4.0
  %v102 = vsub.f32 %v78, 4.0
  %v103 = vsub.f32 %v79, 4.0
  %v104 = vsub.f32 %v80, 4.0
  %v105 = vsub.f32 %v81, 4.0
  %v106 = vmul.f32 %v98, 0.25
  %v107 = vmul.f32 %v99, 0.25
  %v108 = vmul.f32 %v100, 0.25
  %v109 = vmul.f32 %v101, 0.25
  %v110 = vmul.f32 %v102, 0.25
  %v111 = vmul.f32 %v103, 0.25
  %v112 = vmul.f32 %v104, 0.25
  %v113 = vmul.f32 %v105, 0.25
  %v114 = vld [vmem:[%s0] ss:$2 sm:$0xf]
  %v116 = vlaneseq
  %v117 = vshrl.u32 %v116, 7
  %v118 = vsub.s32 0, %v117
  %v119 = vrot.slane %v114, %v118
  %v120 = vlaneseq
  %v121 = vshrl.u32 %v120, 7
  %v122 = vsub.s32 1, %v121
  %v123 = vrot.slane %v114, %v122
  %v124 = vlaneseq
  %v125 = vshrl.u32 %v124, 7
  %v126 = vsub.s32 2, %v125
  %v127 = vrot.slane %v114, %v126
  %v128 = vlaneseq
  %v129 = vshrl.u32 %v128, 7
  %v130 = vsub.s32 3, %v129
  %v131 = vrot.slane %v114, %v130
  %v136 = vmul.f32 %v90, %v119
  %v137 = vmul.f32 %v90, %v123
  %v138 = vmul.f32 %v90, %v127
  %v139 = vmul.f32 %v90, %v131
  %v140 = vmul.f32 %v91, %v119
  %v141 = vmul.f32 %v91, %v123
  %v142 = vmul.f32 %v91, %v127
  %v143 = vmul.f32 %v91, %v131
  %v144 = vmul.f32 %v92, %v119
  %v145 = vmul.f32 %v92, %v123
  %v146 = vmul.f32 %v92, %v127
  %v147 = vmul.f32 %v92, %v131
  %v148 = vmul.f32 %v93, %v119
  %v149 = vmul.f32 %v93, %v123
  %v150 = vmul.f32 %v93, %v127
  %v151 = vmul.f32 %v93, %v131
  %v152 = vmul.f32 %v94, %v119
  %v153 = vmul.f32 %v94, %v123
  %v154 = vmul.f32 %v94, %v127
  %v155 = vmul.f32 %v94, %v131
  %v156 = vmul.f32 %v95, %v119
  %v157 = vmul.f32 %v95, %v123
  %v158 = vmul.f32 %v95, %v127
  %v159 = vmul.f32 %v95, %v131
  %v160 = vmul.f32 %v96, %v119
  %v161 = vmul.f32 %v96, %v123
  %v162 = vmul.f32 %v96, %v127
  %v163 = vmul.f32 %v96, %v131
  %v164 = vmul.f32 %v97, %v119
  %v165 = vmul.f32 %v97, %v123
  %v166 = vmul.f32 %v97, %v127
  %v167 = vmul.f32 %v97, %v131
  %s168 = scalar_lea.vmem %s0, 1
  %v169 = vld [vmem:[%s168] ss:$2 sm:$0xf]
  %v171 = vlaneseq
  %v172 = vshrl.u32 %v171, 7
  %v173 = vsub.s32 0, %v172
  %v174 = vrot.slane %v169, %v173
  %v175 = vlaneseq
  %v176 = vshrl.u32 %v175, 7
  %v177 = vsub.s32 1, %v176
  %v178 = vrot.slane %v169, %v177
  %v179 = vlaneseq
  %v180 = vshrl.u32 %v179, 7
  %v181 = vsub.s32 2, %v180
  %v182 = vrot.slane %v169, %v181
  %v183 = vlaneseq
  %v184 = vshrl.u32 %v183, 7
  %v185 = vsub.s32 3, %v184
  %v186 = vrot.slane %v169, %v185
  %v191 = vmul.f32 %v106, %v174
  %v192 = vmul.f32 %v106, %v178
  %v193 = vmul.f32 %v106, %v182
  %v194 = vmul.f32 %v106, %v186
  %v195 = vmul.f32 %v107, %v174
  %v196 = vmul.f32 %v107, %v178
  %v197 = vmul.f32 %v107, %v182
  %v198 = vmul.f32 %v107, %v186
  %v199 = vmul.f32 %v108, %v174
  %v200 = vmul.f32 %v108, %v178
  %v201 = vmul.f32 %v108, %v182
  %v202 = vmul.f32 %v108, %v186
  %v203 = vmul.f32 %v109, %v174
  %v204 = vmul.f32 %v109, %v178
  %v205 = vmul.f32 %v109, %v182
  %v206 = vmul.f32 %v109, %v186
  %v207 = vmul.f32 %v110, %v174
  %v208 = vmul.f32 %v110, %v178
  %v209 = vmul.f32 %v110, %v182
  %v210 = vmul.f32 %v110, %v186
  %v211 = vmul.f32 %v111, %v174
  %v212 = vmul.f32 %v111, %v178
  %v213 = vmul.f32 %v111, %v182
  %v214 = vmul.f32 %v111, %v186
  %v215 = vmul.f32 %v112, %v174
  %v216 = vmul.f32 %v112, %v178
  %v217 = vmul.f32 %v112, %v182
  %v218 = vmul.f32 %v112, %v186
  %v219 = vmul.f32 %v113, %v174
  %v220 = vmul.f32 %v113, %v178
  %v221 = vmul.f32 %v113, %v182
  %v222 = vmul.f32 %v113, %v186
  %v223 = vadd.f32 %v136, %v191
  %v224 = vadd.f32 %v137, %v192
  %v225 = vadd.f32 %v138, %v193
  %v226 = vadd.f32 %v139, %v194
  %v227 = vadd.f32 %v140, %v195
  %v228 = vadd.f32 %v141, %v196
  %v229 = vadd.f32 %v142, %v197
  %v230 = vadd.f32 %v143, %v198
  %v231 = vadd.f32 %v144, %v199
  %v232 = vadd.f32 %v145, %v200
  %v233 = vadd.f32 %v146, %v201
  %v234 = vadd.f32 %v147, %v202
  %v235 = vadd.f32 %v148, %v203
  %v236 = vadd.f32 %v149, %v204
  %v237 = vadd.f32 %v150, %v205
  %v238 = vadd.f32 %v151, %v206
  %v239 = vadd.f32 %v152, %v207
  %v240 = vadd.f32 %v153, %v208
  %v241 = vadd.f32 %v154, %v209
  %v242 = vadd.f32 %v155, %v210
  %v243 = vadd.f32 %v156, %v211
  %v244 = vadd.f32 %v157, %v212
  %v245 = vadd.f32 %v158, %v213
  %v246 = vadd.f32 %v159, %v214
  %v247 = vadd.f32 %v160, %v215
  %v248 = vadd.f32 %v161, %v216
  %v249 = vadd.f32 %v162, %v217
  %v250 = vadd.f32 %v163, %v218
  %v251 = vadd.f32 %v164, %v219
  %v252 = vadd.f32 %v165, %v220
  %v253 = vadd.f32 %v166, %v221
  %v254 = vadd.f32 %v167, %v222
  %v255 = vld [vmem:[%s1] sm:$0xf]
  %v257 = vlaneseq
  %v258 = vshrl.u32 %v257, 7
  %v259 = vsub.s32 0, %v258
  %v260 = vrot.slane %v255, %v259
  %v261 = vlaneseq
  %v262 = vshrl.u32 %v261, 7
  %v263 = vsub.s32 1, %v262
  %v264 = vrot.slane %v255, %v263
  %v265 = vlaneseq
  %v266 = vshrl.u32 %v265, 7
  %v267 = vsub.s32 2, %v266
  %v268 = vrot.slane %v255, %v267
  %v269 = vlaneseq
  %v270 = vshrl.u32 %v269, 7
  %v271 = vsub.s32 3, %v270
  %v272 = vrot.slane %v255, %v271
  %v277 = vadd.f32 %v223, %v260
  %v278 = vadd.f32 %v224, %v264
  %v279 = vadd.f32 %v225, %v268
  %v280 = vadd.f32 %v226, %v272
  %v281 = vadd.f32 %v227, %v260
  %v282 = vadd.f32 %v228, %v264
  %v283 = vadd.f32 %v229, %v268
  %v284 = vadd.f32 %v230, %v272
  %v285 = vadd.f32 %v231, %v260
  %v286 = vadd.f32 %v232, %v264
  %v287 = vadd.f32 %v233, %v268
  %v288 = vadd.f32 %v234, %v272
  %v289 = vadd.f32 %v235, %v260
  %v290 = vadd.f32 %v236, %v264
  %v291 = vadd.f32 %v237, %v268
  %v292 = vadd.f32 %v238, %v272
  %v293 = vadd.f32 %v239, %v260
  %v294 = vadd.f32 %v240, %v264
  %v295 = vadd.f32 %v241, %v268
  %v296 = vadd.f32 %v242, %v272
  %v297 = vadd.f32 %v243, %v260
  %v298 = vadd.f32 %v244, %v264
  %v299 = vadd.f32 %v245, %v268
  %v300 = vadd.f32 %v246, %v272
  %v301 = vadd.f32 %v247, %v260
  %v302 = vadd.f32 %v248, %v264
  %v303 = vadd.f32 %v249, %v268
  %v304 = vadd.f32 %v250, %v272
  %v305 = vadd.f32 %v251, %v260
  %v306 = vadd.f32 %v252, %v264
  %v307 = vadd.f32 %v253, %v268
  %v308 = vadd.f32 %v254, %v272
  %v309 = vmax.f32 %v277, 0.0
  %v310 = vmax.f32 %v278, 0.0
  %v311 = vmax.f32 %v279, 0.0
  %v312 = vmax.f32 %v280, 0.0
  %v313 = vmax.f32 %v281, 0.0
  %v314 = vmax.f32 %v282, 0.0
  %v315 = vmax.f32 %v283, 0.0
  %v316 = vmax.f32 %v284, 0.0
  %v317 = vmax.f32 %v285, 0.0
  %v318 = vmax.f32 %v286, 0.0
  %v319 = vmax.f32 %v287, 0.0
  %v320 = vmax.f32 %v288, 0.0
  %v321 = vmax.f32 %v289, 0.0
  %v322 = vmax.f32 %v290, 0.0
  %v323 = vmax.f32 %v291, 0.0
  %v324 = vmax.f32 %v292, 0.0
  %v325 = vmax.f32 %v293, 0.0
  %v326 = vmax.f32 %v294, 0.0
  %v327 = vmax.f32 %v295, 0.0
  %v328 = vmax.f32 %v296, 0.0
  %v329 = vmax.f32 %v297, 0.0
  %v330 = vmax.f32 %v298, 0.0
  %v331 = vmax.f32 %v299, 0.0
  %v332 = vmax.f32 %v300, 0.0
  %v333 = vmax.f32 %v301, 0.0
  %v334 = vmax.f32 %v302, 0.0
  %v335 = vmax.f32 %v303, 0.0
  %v336 = vmax.f32 %v304, 0.0
  %v337 = vmax.f32 %v305, 0.0
  %v338 = vmax.f32 %v306, 0.0
  %v339 = vmax.f32 %v307, 0.0
  %v340 = vmax.f32 %v308, 0.0
  %v341 = vld [vmem:[%s2] sm:$0xff]
  %v342 = vld [vmem:[%s2 + $0x8] sm:$0xff]
  %v343 = vld [vmem:[%s2 + $0x10] sm:$0xff]
  %v344 = vld [vmem:[%s2 + $0x18] sm:$0xff]
  %v345 = vld [vmem:[%s2 + $0x20] sm:$0xff]
  %v346 = vld [vmem:[%s2 + $0x28] sm:$0xff]
  %v347 = vld [vmem:[%s2 + $0x30] sm:$0xff]
  %v348 = vld [vmem:[%s2 + $0x38] sm:$0xff]
  %v349 = vld [vmem:[%s2 + $0x40] sm:$0xff]
  %v350 = vld [vmem:[%s2 + $0x48] sm:$0xff]
  %v351 = vld [vmem:[%s2 + $0x50] sm:$0xff]
  %v352 = vld [vmem:[%s2 + $0x58] sm:$0xff]
  %v353 = vld [vmem:[%s2 + $0x60] sm:$0xff]
  %v354 = vld [vmem:[%s2 + $0x68] sm:$0xff]
  %v355 = vld [vmem:[%s2 + $0x70] sm:$0xff]
  %v356 = vld [vmem:[%s2 + $0x78] sm:$0xff]
  %v357 = vld [vmem:[%s2 + $0x80] sm:$0xff]
  %v358 = vld [vmem:[%s2 + $0x88] sm:$0xff]
  %v359 = vld [vmem:[%s2 + $0x90] sm:$0xff]
  %v360 = vld [vmem:[%s2 + $0x98] sm:$0xff]
  %v361 = vld [vmem:[%s2 + $0xa0] sm:$0xff]
  %v362 = vld [vmem:[%s2 + $0xa8] sm:$0xff]
  %v363 = vld [vmem:[%s2 + $0xb0] sm:$0xff]
  %v364 = vld [vmem:[%s2 + $0xb8] sm:$0xff]
  %v365 = vld [vmem:[%s2 + $0xc0] sm:$0xff]
  %v366 = vld [vmem:[%s2 + $0xc8] sm:$0xff]
  %v367 = vld [vmem:[%s2 + $0xd0] sm:$0xff]
  %v368 = vld [vmem:[%s2 + $0xd8] sm:$0xff]
  %v369 = vld [vmem:[%s2 + $0xe0] sm:$0xff]
  %v370 = vld [vmem:[%s2 + $0xe8] sm:$0xff]
  %v371 = vld [vmem:[%s2 + $0xf0] sm:$0xff]
  %v372 = vld [vmem:[%s2 + $0xf8] sm:$0xff]
  %v373 = vld [vmem:[%s2 + $0x100] sm:$0xff]
  %v374 = vld [vmem:[%s2 + $0x108] sm:$0xff]
  %v375 = vld [vmem:[%s2 + $0x110] sm:$0xff]
  %v376 = vld [vmem:[%s2 + $0x118] sm:$0xff]
  %v377 = vld [vmem:[%s2 + $0x120] sm:$0xff]
  %v378 = vld [vmem:[%s2 + $0x128] sm:$0xff]
  %v379 = vld [vmem:[%s2 + $0x130] sm:$0xff]
  %v380 = vld [vmem:[%s2 + $0x138] sm:$0xff]
  %v381 = vld [vmem:[%s2 + $0x140] sm:$0xff]
  %v382 = vld [vmem:[%s2 + $0x148] sm:$0xff]
  %v383 = vld [vmem:[%s2 + $0x150] sm:$0xff]
  %v384 = vld [vmem:[%s2 + $0x158] sm:$0xff]
  %v385 = vld [vmem:[%s2 + $0x160] sm:$0xff]
  %v386 = vld [vmem:[%s2 + $0x168] sm:$0xff]
  %v387 = vld [vmem:[%s2 + $0x170] sm:$0xff]
  %v388 = vld [vmem:[%s2 + $0x178] sm:$0xff]
  %v389 = vld [vmem:[%s2 + $0x180] sm:$0xff]
  %v390 = vld [vmem:[%s2 + $0x188] sm:$0xff]
  %v391 = vld [vmem:[%s2 + $0x190] sm:$0xff]
  %v392 = vld [vmem:[%s2 + $0x198] sm:$0xff]
  %v393 = vld [vmem:[%s2 + $0x1a0] sm:$0xff]
  %v394 = vld [vmem:[%s2 + $0x1a8] sm:$0xff]
  %v395 = vld [vmem:[%s2 + $0x1b0] sm:$0xff]
  %v396 = vld [vmem:[%s2 + $0x1b8] sm:$0xff]
  %v397 = vld [vmem:[%s2 + $0x1c0] sm:$0xff]
  %v398 = vld [vmem:[%s2 + $0x1c8] sm:$0xff]
  %v399 = vld [vmem:[%s2 + $0x1d0] sm:$0xff]
  %v400 = vld [vmem:[%s2 + $0x1d8] sm:$0xff]
  %v401 = vld [vmem:[%s2 + $0x1e0] sm:$0xff]
  %v402 = vld [vmem:[%s2 + $0x1e8] sm:$0xff]
  %v403 = vld [vmem:[%s2 + $0x1f0] sm:$0xff]
  %v404 = vld [vmem:[%s2 + $0x1f8] sm:$0xff]
  %405 = vmatprep.subr.mxu0 0.0
  %406 = vmatpush1.msra.mxu0 %v341
  %407 = vmatprep.subr.mxu0 0.0
  %408 = vmatpush1.msra.mxu0 %v342
  %409 = vmatprep.subr.mxu0 0.0
  %410 = vmatpush1.msra.mxu0 %v343
  %411 = vmatprep.subr.mxu0 0.0
  %412 = vmatpush1.msra.mxu0 %v344
  %413 = vmatprep.subr.mxu0 0.0
  %414 = vmatpush1.msra.mxu0 %v345
  %415 = vmatprep.subr.mxu0 0.0
  %416 = vmatpush1.msra.mxu0 %v346
  %417 = vmatprep.subr.mxu0 0.0
  %418 = vmatpush1.msra.mxu0 %v347
  %419 = vmatprep.subr.mxu0 0.0
  %420 = vmatpush1.msra.mxu0 %v348
  %421 = vmatprep.subr.mxu0 0.0
  %422 = vmatpush1.msra.mxu0 %v349
  %423 = vmatprep.subr.mxu0 0.0
  %424 = vmatpush1.msra.mxu0 %v350
  %425 = vmatprep.subr.mxu0 0.0
  %426 = vmatpush1.msra.mxu0 %v351
  %427 = vmatprep.subr.mxu0 0.0
  %428 = vmatpush1.msra.mxu0 %v352
  %429 = vmatprep.subr.mxu0 0.0
  %430 = vmatpush1.msra.mxu0 %v353
  %431 = vmatprep.subr.mxu0 0.0
  %432 = vmatpush1.msra.mxu0 %v354
  %433 = vmatprep.subr.mxu0 0.0
  %434 = vmatpush1.msra.mxu0 %v355
  %435 = vmatprep.subr.mxu0 0.0
  %436 = vmatpush1.msra.mxu0 %v356
  %437 = vmatprep.subr.mxu0 0.0
  %438 = vmatpush1.msra.mxu0 %v357
  %439 = vmatprep.subr.mxu0 0.0
  %440 = vmatpush1.msra.mxu0 %v358
  %441 = vmatprep.subr.mxu0 0.0
  %442 = vmatpush1.msra.mxu0 %v359
  %443 = vmatprep.subr.mxu0 0.0
  %444 = vmatpush1.msra.mxu0 %v360
  %445 = vmatprep.subr.mxu0 0.0
  %446 = vmatpush1.msra.mxu0 %v361
  %447 = vmatprep.subr.mxu0 0.0
  %448 = vmatpush1.msra.mxu0 %v362
  %449 = vmatprep.subr.mxu0 0.0
  %450 = vmatpush1.msra.mxu0 %v363
  %451 = vmatprep.subr.mxu0 0.0
  %452 = vmatpush1.msra.mxu0 %v364
  %453 = vmatprep.subr.mxu0 0.0
  %454 = vmatpush1.msra.mxu0 %v365
  %455 = vmatprep.subr.mxu0 0.0
  %456 = vmatpush1.msra.mxu0 %v366
  %457 = vmatprep.subr.mxu0 0.0
  %458 = vmatpush1.msra.mxu0 %v367
  %459 = vmatprep.subr.mxu0 0.0
  %460 = vmatpush1.msra.mxu0 %v368
  %461 = vmatprep.subr.mxu0 0.0
  %462 = vmatpush1.msra.mxu0 %v369
  %463 = vmatprep.subr.mxu0 0.0
  %464 = vmatpush1.msra.mxu0 %v370
  %465 = vmatprep.subr.mxu0 0.0
  %466 = vmatpush1.msra.mxu0 %v371
  %467 = vmatprep.subr.mxu0 0.0
  %468 = vmatpush1.msra.mxu0 %v372
  %469 = vmatprep.mubr.f32.mxu0 %v310
  %470 = vmatmul.mubr.f32.gmra.mrb[0].mxu0 %v309
  %v471 = vpop.f32.mrb[0].mxu0
  %v472 = vadd.f32 0.0, %v471
  %v473 = vpop.f32.mrb[0].mxu0
  %474 = vmatprep.mubr.f32.mxu0 %v314
  %475 = vmatmul.mubr.f32.gmra.mrb[0].mxu0 %v313
  %v476 = vpop.f32.mrb[0].mxu0
  %v477 = vadd.f32 0.0, %v476
  %v478 = vpop.f32.mrb[0].mxu0
  %479 = vmatprep.mubr.f32.mxu0 %v318
  %480 = vmatmul.mubr.f32.gmra.mrb[0].mxu0 %v317
  %v481 = vpop.f32.mrb[0].mxu0
  %v482 = vadd.f32 0.0, %v481
  %v483 = vpop.f32.mrb[0].mxu0
  %484 = vmatprep.mubr.f32.mxu0 %v322
  %485 = vmatmul.mubr.f32.gmra.mrb[0].mxu0 %v321
  %v486 = vpop.f32.mrb[0].mxu0
  %v487 = vadd.f32 0.0, %v486
  %v488 = vpop.f32.mrb[0].mxu0
  %489 = vmatprep.mubr.f32.mxu0 %v326
  %490 = vmatmul.mubr.f32.gmra.mrb[0].mxu0 %v325
  %v491 = vpop.f32.mrb[0].mxu0
  %v492 = vadd.f32 0.0, %v491
  %v493 = vpop.f32.mrb[0].mxu0
  %494 = vmatprep.mubr.f32.mxu0 %v330
  %495 = vmatmul.mubr.f32.gmra.mrb[0].mxu0 %v329
  %v496 = vpop.f32.mrb[0].mxu0
  %v497 = vadd.f32 0.0, %v496
  %v498 = vpop.f32.mrb[0].mxu0
  %499 = vmatprep.mubr.f32.mxu0 %v334
  %500 = vmatmul.mubr.f32.gmra.mrb[0].mxu0 %v333
  %v501 = vpop.f32.mrb[0].mxu0
  %v502 = vadd.f32 0.0, %v501
  %v503 = vpop.f32.mrb[0].mxu0
  %504 = vmatprep.mubr.f32.mxu0 %v338
  %505 = vmatmul.mubr.f32.gmra.mrb[0].mxu0 %v337
  %v506 = vpop.f32.mrb[0].mxu0
  %v507 = vadd.f32 0.0, %v506
  %v508 = vpop.f32.mrb[0].mxu0
  %509 = vdwg.mxu0
  %510 = vmatprep.subr.mxu0 0.0
  %511 = vmatpush1.msra.mxu0 %v373
  %512 = vmatprep.subr.mxu0 0.0
  %513 = vmatpush1.msra.mxu0 %v374
  %514 = vmatprep.subr.mxu0 0.0
  %515 = vmatpush1.msra.mxu0 %v375
  %516 = vmatprep.subr.mxu0 0.0
  %517 = vmatpush1.msra.mxu0 %v376
  %518 = vmatprep.subr.mxu0 0.0
  %519 = vmatpush1.msra.mxu0 %v377
  %520 = vmatprep.subr.mxu0 0.0
  %521 = vmatpush1.msra.mxu0 %v378
  %522 = vmatprep.subr.mxu0 0.0
  %523 = vmatpush1.msra.mxu0 %v379
  %524 = vmatprep.subr.mxu0 0.0
  %525 = vmatpush1.msra.mxu0 %v380
  %526 = vmatprep.subr.mxu0 0.0
  %527 = vmatpush1.msra.mxu0 %v381
  %528 = vmatprep.subr.mxu0 0.0
  %529 = vmatpush1.msra.mxu0 %v382
  %530 = vmatprep.subr.mxu0 0.0
  %531 = vmatpush1.msra.mxu0 %v383
  %532 = vmatprep.subr.mxu0 0.0
  %533 = vmatpush1.msra.mxu0 %v384
  %534 = vmatprep.subr.mxu0 0.0
  %535 = vmatpush1.msra.mxu0 %v385
  %536 = vmatprep.subr.mxu0 0.0
  %537 = vmatpush1.msra.mxu0 %v386
  %538 = vmatprep.subr.mxu0 0.0
  %539 = vmatpush1.msra.mxu0 %v387
  %540 = vmatprep.subr.mxu0 0.0
  %541 = vmatpush1.msra.mxu0 %v388
  %542 = vmatprep.subr.mxu0 0.0
  %543 = vmatpush1.msra.mxu0 %v389
  %544 = vmatprep.subr.mxu0 0.0
  %545 = vmatpush1.msra.mxu0 %v390
  %546 = vmatprep.subr.mxu0 0.0
  %547 = vmatpush1.msra.mxu0 %v391
  %548 = vmatprep.subr.mxu0 0.0
  %549 = vmatpush1.msra.mxu0 %v392
  %550 = vmatprep.subr.mxu0 0.0
  %551 = vmatpush1.msra.mxu0 %v393
  %552 = vmatprep.subr.mxu0 0.0
  %553 = vmatpush1.msra.mxu0 %v394
  %554 = vmatprep.subr.mxu0 0.0
  %555 = vmatpush1.msra.mxu0 %v395
  %556 = vmatprep.subr.mxu0 0.0
  %557 = vmatpush1.msra.mxu0 %v396
  %558 = vmatprep.subr.mxu0 0.0
  %559 = vmatpush1.msra.mxu0 %v397
  %560 = vmatprep.subr.mxu0 0.0
  %561 = vmatpush1.msra.mxu0 %v398
  %562 = vmatprep.subr.mxu0 0.0
  %563 = vmatpush1.msra.mxu0 %v399
  %564 = vmatprep.subr.mxu0 0.0
  %565 = vmatpush1.msra.mxu0 %v400
  %566 = vmatprep.subr.mxu0 0.0
  %567 = vmatpush1.msra.mxu0 %v401
  %568 = vmatprep.subr.mxu0 0.0
  %569 = vmatpush1.msra.mxu0 %v402
  %570 = vmatprep.subr.mxu0 0.0
  %571 = vmatpush1.msra.mxu0 %v403
  %572 = vmatprep.subr.mxu0 0.0
  %573 = vmatpush1.msra.mxu0 %v404
  %574 = vmatprep.mubr.f32.mxu0 %v312
  %575 = vmatmul.mubr.f32.gmra.mrb[0].mxu0 %v311
  %v576 = vpop.f32.mrb[0].mxu0
  %v577 = vadd.f32 %v472, %v576
  %v578 = vpop.f32.mrb[0].mxu0
  %579 = vmatprep.mubr.f32.mxu0 %v316
  %580 = vmatmul.mubr.f32.gmra.mrb[0].mxu0 %v315
  %v581 = vpop.f32.mrb[0].mxu0
  %v582 = vadd.f32 %v477, %v581
  %v583 = vpop.f32.mrb[0].mxu0
  %584 = vmatprep.mubr.f32.mxu0 %v320
  %585 = vmatmul.mubr.f32.gmra.mrb[0].mxu0 %v319
  %v586 = vpop.f32.mrb[0].mxu0
  %v587 = vadd.f32 %v482, %v586
  %v588 = vpop.f32.mrb[0].mxu0
  %589 = vmatprep.mubr.f32.mxu0 %v324
  %590 = vmatmul.mubr.f32.gmra.mrb[0].mxu0 %v323
  %v591 = vpop.f32.mrb[0].mxu0
  %v592 = vadd.f32 %v487, %v591
  %v593 = vpop.f32.mrb[0].mxu0
  %594 = vmatprep.mubr.f32.mxu0 %v328
  %595 = vmatmul.mubr.f32.gmra.mrb[0].mxu0 %v327
  %v596 = vpop.f32.mrb[0].mxu0
  %v597 = vadd.f32 %v492, %v596
  %v598 = vpop.f32.mrb[0].mxu0
  %599 = vmatprep.mubr.f32.mxu0 %v332
  %600 = vmatmul.mubr.f32.gmra.mrb[0].mxu0 %v331
  %v601 = vpop.f32.mrb[0].mxu0
  %v602 = vadd.f32 %v497, %v601
  %v603 = vpop.f32.mrb[0].mxu0
  %604 = vmatprep.mubr.f32.mxu0 %v336
  %605 = vmatmul.mubr.f32.gmra.mrb[0].mxu0 %v335
  %v606 = vpop.f32.mrb[0].mxu0
  %v607 = vadd.f32 %v502, %v606
  %v608 = vpop.f32.mrb[0].mxu0
  %609 = vmatprep.mubr.f32.mxu0 %v340
  %610 = vmatmul.mubr.f32.gmra.mrb[0].mxu0 %v339
  %v611 = vpop.f32.mrb[0].mxu0
  %v612 = vadd.f32 %v507, %v611
  %v613 = vpop.f32.mrb[0].mxu0
  %614 = vdwg.mxu0
  %vm615 = vcmask 261120
  %616 = vst.msk [vmem:[%s3] sm:$0xff] %vm615, %v577
  %617 = vst.msk [vmem:[%s3 + $0x8] sm:$0xff] %vm615, %v582
  %618 = vst.msk [vmem:[%s3 + $0x10] sm:$0xff] %vm615, %v587
  %619 = vst.msk [vmem:[%s3 + $0x18] sm:$0xff] %vm615, %v592
  %620 = vst.msk [vmem:[%s3 + $0x20] sm:$0xff] %vm615, %v597
  %621 = vst.msk [vmem:[%s3 + $0x28] sm:$0xff] %vm615, %v602
  %622 = vst.msk [vmem:[%s3 + $0x30] sm:$0xff] %vm615, %v607
  %623 = vst.msk [vmem:[%s3 + $0x38] sm:$0xff] %vm615, %v612
  // Predicated region
  $region14: #{tpu_custom_call.1} parent=0 // pred_check
    _
  $region15: #{tpu_custom_call.1} parent=0 // pred_check_branch
    %625 = sbr.rel (0) target = $region17
  $region16: #{tpu_custom_call.1} parent=0 // pred_region
    _
  $region17: #{tpu_custom_call.1} parent=0 // pred_fallthru
    _
  // Predicated region
  $region18: #{tpu_custom_call.1} parent=0 // pred_check
    _
  $region19: #{tpu_custom_call.1} parent=0 // pred_check_branch
    %627 = sbr.rel (0) target = $region21
  $region20: #{tpu_custom_call.1} parent=0 // pred_region
    _
  $region21: #{tpu_custom_call.1} parent=0 // pred_fallthru
    _

</llo_original>
